<compile_context>
chip_gen: v7x
topology: tpu7x:2x2x1
jax: 0.10.0
libtpu: 0.0.40
codegen_flags: <defaults>
</compile_context>

<pallas_src>
import functools

import jax
import jax.numpy as jnp
from jax.experimental import pallas as pl
from jax.experimental.pallas import tpu as pltpu

_LANES = 1024            # lane-dense slab width (large multiple of 128)
_MIN_GRID_STEPS = 4      # keep >= 2 steps per TensorCore on dual-TC chips
_ROW_QUANTUM = 32        # row-block granularity safe for uint8 (32,128) tiling


def _round_up(a, b):
    return ((a + b - 1) // b) * b


@functools.lru_cache(maxsize=1)
def _tm_max():
    """Max rows per tile.

    v6e/v7x: 1024 rows (4 MiB f32 input tile; ~18 MiB double-buffered working
    set, inside the ~32 MiB default scoped VMEM).  Other chips (v5e has only a
    ~16 MiB default scoped-VMEM budget): 512 rows (~9 MiB double-buffered).
    """
    try:
        kind = jax.devices()[0].device_kind.lower()
    except Exception:  # pragma: no cover - defensive
        return 512
    if ("v6" in kind) or ("v7" in kind) or ("7x" in kind):
        return 1024
    return 512


def _pick_tm(rows):
    """Rows per tile: as big as VMEM allows, but >= _MIN_GRID_STEPS steps."""
    if rows <= _ROW_QUANTUM:
        return rows                                  # single full-extent block
    tm = _round_up(pl.cdiv(rows, _MIN_GRID_STEPS), _ROW_QUANTUM)
    return min(tm, _tm_max(), rows)


def _q_sym_kernel(scal_ref, x_ref, out_ref, qidx_ref):
    """PACT quantize-dequantize on one lane-dense (tm, 1024) VMEM tile.

    scal_ref (SMEM, f32[4]) holds [clip_val, clip_valn, scale, inv_scale] so
    learned clip values never force a recompile; the extra scalar broadcasts
    ride in VALU slack on this HBM-bound kernel.
    """
    cv = scal_ref[0]
    cvn = scal_ref[1]
    scale = scal_ref[2]
    inv_scale = scal_ref[3]
    # Math in f32 (matches the PyTorch float path; also safe for bf16 inputs).
    x = x_ref[...].astype(jnp.float32)
    x_c = jnp.clip(x, cvn, cv)
    q = jnp.round((x_c - cvn) * scale)               # code in [0, 2^b - 1]
    out_ref[...] = (q * inv_scale + cvn).astype(out_ref.dtype)
    qidx_ref[...] = q.astype(qidx_ref.dtype)


def _q_sym_kernel_no_idx(scal_ref, x_ref, out_ref):
    """Same as above but skips the q_idx store (less HBM write traffic)."""
    cv = scal_ref[0]
    cvn = scal_ref[1]
    scale = scal_ref[2]
    inv_scale = scal_ref[3]
    x = x_ref[...].astype(jnp.float32)
    x_c = jnp.clip(x, cvn, cv)
    q = jnp.round((x_c - cvn) * scale)
    out_ref[...] = (q * inv_scale + cvn).astype(out_ref.dtype)


@functools.partial(jax.jit, static_argnames=("num_bits", "emit_q_idx"))
def _pallas_quantize(x, clip_val, clip_valn, *, num_bits, emit_q_idx=True):
    """Tiled Pallas quantize-dequantize.  Returns (dequantized, q_idx|None)."""
    orig_shape = x.shape
    orig_dtype = x.dtype
    total = int(x.size)

    # ---- lane-dense slab ----------------------------------------------------
    rows = pl.cdiv(total, _LANES)
    padded_total = rows * _LANES
    x_flat = x.reshape(-1)
    if padded_total != total:
        # Tail-pad to the next 1024 multiple only.  Totals that are already a
        # multiple of 1024 (common for NN tensors) take the copy-free path:
        # no pad here and no output slice below.
        x_flat = jnp.pad(x_flat, (0, padded_total - total))
    x2 = x_flat.reshape(rows, _LANES)

    # ---- runtime scalars (SMEM) ----------------------------------------------
    n_levels = float(2 ** num_bits - 1)
    cv = jnp.asarray(clip_val, jnp.float32)
    cvn = jnp.asarray(clip_valn, jnp.float32)
    scale = n_levels / (cv - cvn)
    inv_scale = (cv - cvn) / n_levels
    scalars = jnp.stack([cv, cvn, scale, inv_scale]).astype(jnp.float32)

    qidx_dtype = jnp.uint8 if num_bits <= 8 else jnp.int32

    # ---- grid / specs ---------------------------------------------------------
    tm = _pick_tm(rows)
    grid = (pl.cdiv(rows, tm),)          # final row-block may be partial

    smem_spec = pl.BlockSpec(memory_space=pltpu.MemorySpace.SMEM)
    tile_spec = pl.BlockSpec((tm, _LANES), lambda i: (i, 0))

    qidx_bytes = jnp.dtype(qidx_dtype).itemsize if emit_q_idx else 0
    cost = pl.CostEstimate(
        flops=7 * padded_total,
        transcendentals=0,
        bytes_accessed=padded_total * (x.dtype.itemsize
                                       + jnp.dtype(orig_dtype).itemsize
                                       + qidx_bytes),
    )
    cparams = pltpu.CompilerParams(
        dimension_semantics=("parallel",),   # shard grid across TCs on v7x
    )

    if emit_q_idx:
        out2, qidx2 = pl.pallas_call(
            _q_sym_kernel,
            grid=grid,
            out_shape=(
                jax.ShapeDtypeStruct((rows, _LANES), orig_dtype),
                jax.ShapeDtypeStruct((rows, _LANES), qidx_dtype),
            ),
            in_specs=[smem_spec, tile_spec],
            out_specs=(tile_spec, tile_spec),
            compiler_params=cparams,
            cost_estimate=cost,
        )(scalars, x2)
    else:
        out2 = pl.pallas_call(
            _q_sym_kernel_no_idx,
            grid=grid,
            out_shape=jax.ShapeDtypeStruct((rows, _LANES), orig_dtype),
            in_specs=[smem_spec, tile_spec],
            out_specs=tile_spec,
            compiler_params=cparams,
            cost_estimate=cost,
        )(scalars, x2)
        qidx2 = None

    if padded_total != total:
        out = out2.reshape(-1)[:total].reshape(orig_shape)
        qidx = None if qidx2 is None else qidx2.reshape(-1)[:total].reshape(orig_shape)
    else:
        out = out2.reshape(orig_shape)
        qidx = None if qidx2 is None else qidx2.reshape(orig_shape)
    return out, qidx


class QSymPallas:
    """JAX/Pallas re-implementation of the PyTorch Q_Sym module."""

    def __init__(self, store_q_idx=True):
        self.num_bit = 32
        self.clip_val = None
        self.clip_valn = None
        self.q_idx = None
        self.store_q_idx = store_q_idx

    def initialize(self, n_bit, clip_init_val, clip_init_valn):
        assert float(clip_init_val) != float(clip_init_valn), (
            "clip_val == clip_valn would give an infinite scale")
        self.num_bit = int(n_bit)
        # Stored as JAX scalars: updating learned clips does not recompile.
        self.clip_val = jnp.float32(clip_init_val)
        self.clip_valn = jnp.float32(clip_init_valn)

    def __call__(self, x):
        if self.num_bit < 32:
            out, q_idx = _pallas_quantize(
                x, self.clip_val, self.clip_valn,
                num_bits=self.num_bit, emit_q_idx=self.store_q_idx)
            if self.store_q_idx:
                # NOTE: side-effect attribute (mirrors the PyTorch module);
                # would capture a tracer if __call__ were wrapped in jax.jit.
                self.q_idx = q_idx
            return out
        # num_bit == 32: identity, exactly as the PyTorch forward.
        return x


def _reference(x, clip_val, clip_valn, num_bits):
    """Pure-JAX reference computed with the same f32 op ordering as the kernel."""
    cv = jnp.float32(clip_val)
    cvn = jnp.float32(clip_valn)
    n_levels = jnp.float32(2 ** num_bits - 1)
    scale = n_levels / (cv - cvn)
    inv_scale = (cv - cvn) / n_levels
    x_c = jnp.clip(x.astype(jnp.float32), cvn, cv)
    q = jnp.round((x_c - cvn) * scale)
    return (q * inv_scale + cvn).astype(x.dtype), q


if __name__ == "__main__":
    key = jax.random.PRNGKey(0)
    x = jax.random.normal(key, (2, 4, 16, 16), dtype=jnp.float32)

    # 1) Default module (num_bit=32) -> identity.
    m_id = QSymPallas()
    y_id = m_id(x)
    assert y_id.shape == x.shape and y_id.dtype == x.dtype

    # 2) 4-bit PACT quantization; total = 2048 (multiple of 1024) -> copy-free path.
    m4 = QSymPallas()
    m4.initialize(n_bit=4, clip_init_val=1.0, clip_init_valn=-1.0)
    y4 = m4(x)
    jax.block_until_ready(y4)
    jax.block_until_ready(m4.q_idx)
    y4_ref, q4_ref = _reference(x, 1.0, -1.0, 4)
    assert jnp.allclose(y4, y4_ref, atol=1e-5), "4-bit dequant mismatch"
    assert jnp.array_equal(m4.q_idx, q4_ref.astype(jnp.uint8)), "4-bit q_idx mismatch"
    assert y4.shape == (2, 4, 16, 16) and y4.dtype == jnp.float32
    assert m4.q_idx.shape == (2, 4, 16, 16) and m4.q_idx.dtype == jnp.uint8

    # 2b) Updated (learned) clip values reuse the same compiled kernel.
    m4.clip_val = jnp.float32(0.75)
    m4.clip_valn = jnp.float32(-0.5)
    y4b = m4(x)
    jax.block_until_ready(y4b)
    y4b_ref, q4b_ref = _reference(x, 0.75, -0.5, 4)
    assert jnp.allclose(y4b, y4b_ref, atol=1e-5), "updated-clip dequant mismatch"
    assert jnp.array_equal(m4.q_idx, q4b_ref.astype(jnp.uint8)), "updated-clip q_idx mismatch"

    # 3) Odd spatial size (total not a multiple of 1024) -> tail-pad path.
    x_odd = jax.random.normal(jax.random.PRNGKey(1), (2, 4, 7, 7), dtype=jnp.float32)
    m8 = QSymPallas()
    m8.initialize(n_bit=8, clip_init_val=2.0, clip_init_valn=-2.0)
    y8 = m8(x_odd)
    jax.block_until_ready(y8)
    y8_ref, q8_ref = _reference(x_odd, 2.0, -2.0, 8)
    assert jnp.allclose(y8, y8_ref, atol=1e-5), "odd-shape dequant mismatch"
    assert jnp.array_equal(m8.q_idx, q8_ref.astype(jnp.uint8)), "odd-shape q_idx mismatch"
    assert m8.q_idx.dtype == jnp.uint8

    # 4) Multi-tile grid with a partial final row-block (rows=40, tm=32).
    x_big = jax.random.normal(jax.random.PRNGKey(2), (10, 4, 32, 32), dtype=jnp.float32)
    m4b = QSymPallas()
    m4b.initialize(n_bit=4, clip_init_val=1.5, clip_init_valn=-1.5)
    yb = m4b(x_big)
    jax.block_until_ready(yb)
    yb_ref, qb_ref = _reference(x_big, 1.5, -1.5, 4)
    assert jnp.allclose(yb, yb_ref, atol=1e-5), "partial-block dequant mismatch"
    assert jnp.array_equal(m4b.q_idx, qb_ref.astype(jnp.uint8)), "partial-block q_idx mismatch"

    # 5) Dequant-only path (q_idx emission skipped -> less HBM write traffic).
    m_no = QSymPallas(store_q_idx=False)
    m_no.initialize(n_bit=4, clip_init_val=1.0, clip_init_valn=-1.0)
    y_no = m_no(x)
    jax.block_until_ready(y_no)
    assert jnp.allclose(y_no, y4_ref, atol=1e-5), "no-qidx dequant mismatch"
    assert m_no.q_idx is None

    print("KERNEL_OK")
</pallas_src>

<mosaic_0001>
module attributes {stable_mosaic.version = 11 : i64} {
  func.func @_q_sym_kernel(%arg0: i32, %arg1: memref<4xf32, #tpu.memory_space<smem>>, %arg2: memref<2x1024xf32, #tpu.memory_space<vmem>>, %arg3: memref<2x1024xf32, #tpu.memory_space<vmem>>, %arg4: memref<2x1024xi8, #tpu.memory_space<vmem>>) attributes {dimension_semantics = [#tpu.dimension_semantics<parallel>], iteration_bounds = array<i64: 1>, scalar_prefetch = 0 : i64, scratch_operands = 0 : i64, tpu.core_type = #tpu.core_type<tc>, window_params = [{transform_indices = @transform_0, window_bounds = array<i64: 4>}, {transform_indices = @transform_1, window_bounds = array<i64: 2, 1024>}, {transform_indices = @transform_2, window_bounds = array<i64: 2, 1024>}, {transform_indices = @transform_3, window_bounds = array<i64: 2, 1024>}]} {
    %c0 = arith.constant 0 : index
    %0 = memref.load %arg1[%c0] : memref<4xf32, #tpu.memory_space<smem>>
    %c1 = arith.constant 1 : index
    %1 = memref.load %arg1[%c1] : memref<4xf32, #tpu.memory_space<smem>>
    %c2 = arith.constant 2 : index
    %2 = memref.load %arg1[%c2] : memref<4xf32, #tpu.memory_space<smem>>
    %c3 = arith.constant 3 : index
    %3 = memref.load %arg1[%c3] : memref<4xf32, #tpu.memory_space<smem>>
    %c0_0 = arith.constant 0 : index
    %c0_1 = arith.constant 0 : index
    %4 = vector.load %arg2[%c0_0, %c0_1] : memref<2x1024xf32, #tpu.memory_space<vmem>>, vector<2x1024xf32>
    %5 = vector.broadcast %1 : f32 to vector<2x1024xf32>
    %6 = arith.maximumf %5, %4 : vector<2x1024xf32>
    %7 = vector.broadcast %0 : f32 to vector<2x1024xf32>
    %8 = arith.minimumf %7, %6 : vector<2x1024xf32>
    %9 = vector.broadcast %1 : f32 to vector<2x1024xf32>
    %10 = arith.subf %8, %9 : vector<2x1024xf32>
    %11 = vector.broadcast %2 : f32 to vector<2x1024xf32>
    %12 = arith.mulf %10, %11 : vector<2x1024xf32>
    %13 = math.roundeven %12 : vector<2x1024xf32>
    %14 = vector.broadcast %3 : f32 to vector<2x1024xf32>
    %15 = arith.mulf %13, %14 : vector<2x1024xf32>
    %16 = vector.broadcast %1 : f32 to vector<2x1024xf32>
    %17 = arith.addf %15, %16 : vector<2x1024xf32>
    %c0_2 = arith.constant 0 : index
    %c0_3 = arith.constant 0 : index
    %18 = vector.load %arg3[%c0_2, %c0_3] : memref<2x1024xf32, #tpu.memory_space<vmem>>, vector<2x1024xf32>
    tpu.vector_store %arg3[%c0_2, %c0_3], %17 {strides = array<i32>} : memref<2x1024xf32, #tpu.memory_space<vmem>>, vector<2x1024xf32>,
    %19 = arith.fptoui %13 : vector<2x1024xf32> to vector<2x1024xi8>
    %c0_4 = arith.constant 0 : index
    %c0_5 = arith.constant 0 : index
    %20 = vector.load %arg4[%c0_4, %c0_5] : memref<2x1024xi8, #tpu.memory_space<vmem>>, vector<2x1024xi8>
    tpu.vector_store %arg4[%c0_4, %c0_5], %19 {strides = array<i32>} : memref<2x1024xi8, #tpu.memory_space<vmem>>, vector<2x1024xi8>,
    return
  }
  func.func @transform_0(%arg0: i32) -> i32 {
    %c0_i32 = arith.constant 0 : i32
    %c0_i32_0 = arith.constant 0 : i32
    return %c0_i32 : i32
  }
  func.func @transform_1(%arg0: i32) -> (i32, i32) {
    %c0_i32 = arith.constant 0 : i32
    %c0_i32_0 = arith.constant 0 : i32
    return %arg0, %c0_i32 : i32, i32
  }
  func.func @transform_2(%arg0: i32) -> (i32, i32) {
    %c0_i32 = arith.constant 0 : i32
    %c0_i32_0 = arith.constant 0 : i32
    return %arg0, %c0_i32 : i32, i32
  }
  func.func @transform_3(%arg0: i32) -> (i32, i32) {
    %c0_i32 = arith.constant 0 : i32
    %c0_i32_0 = arith.constant 0 : i32
    return %arg0, %c0_i32 : i32, i32
  }
}

</mosaic_0001>

<llo_original>
// kernel: _pallas_quantize.1
$region0: #{_pallas_quantize.1}
  #allocation0 [shape = 'u32[]', space=smem, size = 0x4, offset = 0x4, fixed_abs, tag = 'smem constant byte address 0x4 - core index']
  #allocation1 [shape = 'u32[144,128]{1,0:T(1,128)}', space=vmem, size = 0x12000, scoped, tag = 'internal scratch']
  %s0 = inlined_call_operand.vmem [shape: f32[4], index: 0, kind: input, shape index: {}]
  %s1 = inlined_call_operand.vmem [shape: f32[2,1024], index: 1, kind: input, shape index: {}]
  %s2 = inlined_call_operand.vmem [shape: f32[2,1024], index: 2, kind: output, shape index: {0}]
  %s3 = inlined_call_operand.vmem [shape: u8[2,1024], index: 3, kind: output, shape index: {1}]
  %4 = xla_tuple %s2, %s3
  %s5 = sld [smem:[#allocation0]]
  $region30: #{_pallas_quantize.1} parent=0
    _
  %s7 = ssub.s32 1, %s5
  %s8 = scalar_select 0, %s7, %s5
  $region1: #{_pallas_quantize.1} parent=0
    #allocation2 [shape = 'u8[512]{0}', space=smem, size = 0x200, scoped, tag = 'input window, operand 0, single buffered']
    #allocation3 [shape = 's32[1]{0}', space=sflag, size = 0x4, scoped, tag = 'scoped memory for _pallas_quantize.1']
    %9 = vsyncpa [#allocation3], 0
    // Predicated region
    $region2: #{_pallas_quantize.1} parent=1 // pred_check
      _
    $region3: #{_pallas_quantize.1} parent=1 // pred_check_branch
      %11 = sbr.rel (0) target = $region5
    $region4: #{_pallas_quantize.1} parent=1 // pred_region
      %s13 = ssub.s32 16, 16
      %14 = vsyncadd [#allocation3], %s13
      %s16 = sshll.u32 %s0, 4
      %s17 = int_to_ptr.vmem [resolvable:$true] %s16
      %19 = dma.vmem_to_smem %s17, 16, [#allocation2], [#allocation3]
    $region5: #{_pallas_quantize.1} parent=1 // pred_fallthru
      _
    // Predicated region
    $region6: #{_pallas_quantize.1} parent=1 // pred_check
      _
    $region7: #{_pallas_quantize.1} parent=1 // pred_check_branch
      %21 = sbr.rel (0) target = $region9
    $region8: #{_pallas_quantize.1} parent=1 // pred_region
      _
    $region9: #{_pallas_quantize.1} parent=1 // pred_fallthru
      _
    // Predicated region
    $region10: #{_pallas_quantize.1} parent=1 // pred_check
      _
    $region11: #{_pallas_quantize.1} parent=1 // pred_check_branch
      %23 = sbr.rel (0) target = $region13
    $region12: #{_pallas_quantize.1} parent=1 // pred_region
      %24 = dma.done [#allocation3], 16
    $region13: #{_pallas_quantize.1} parent=1 // pred_fallthru
      _
    %25 = sfence
    %s26 = sld [smem:[#allocation2]]
    %s27 = sld [smem:[#allocation2 + $0x1]]
    %s28 = sld [smem:[#allocation2 + $0x2]]
    %s29 = sld [smem:[#allocation2 + $0x3]]
    %v30 = vld [vmem:[%s1] sm:$0xff]
    %v31 = vld [vmem:[%s1 + $0x8] sm:$0xff]
    %v32 = vstv %s27
    %v33 = vmax.f32 %v32, %v30
    %v34 = vmax.f32 %v32, %v31
    %v35 = vstv %s26
    %v36 = vmin.f32 %v35, %v33
    %v37 = vmin.f32 %v35, %v34
    %v38 = vsub.f32 %v36, %v32
    %v39 = vsub.f32 %v37, %v32
    %v40 = vstv %s28
    %v41 = vmul.f32 %v38, %v40
    %v42 = vmul.f32 %v39, %v40
    %v43 = vround.ne.pseudo %v41
    %v44 = vround.ne.pseudo %v42
    %v45 = vstv %s29
    %v46 = vmul.f32 %v43, %v45
    %v47 = vmul.f32 %v44, %v45
    %v48 = vadd.f32 %v46, %v32
    %v49 = vadd.f32 %v47, %v32
    %50 = vst [vmem:[%s2] sm:$0xff] %v48
    %51 = vst [vmem:[%s2 + $0x8] sm:$0xff] %v49
    %v54 = vcombine.high %v43, %v43
    %v56 = vunpack.c.l.s4 1983009808
    %v57 = vunpack.c.0.s8 %v56
    %v58 = vlaneseq
    %v59 = vshrl.u32 %v58, 7
    %v60 = vsub.s32 %v57, %v59
    %v61 = vrot.slane %v43, %v60
    %v63 = vunpack.c.l.s4 1983009808
    %v64 = vunpack.c.0.s8 %v63
    %v65 = vlaneseq
    %v66 = vshrl.u32 %v65, 7
    %v67 = vsub.s32 %v64, %v66
    %v68 = vrot.slane %v54, %v67
    %v69 = vcombine.high %v61, %v61
    %v70 = vcombine.high %v68, %v68
    %v71 = vcombine.high %v44, %v44
    %v73 = vunpack.c.l.s4 1983009808
    %v74 = vunpack.c.0.s8 %v73
    %v75 = vlaneseq
    %v76 = vshrl.u32 %v75, 7
    %v77 = vsub.s32 %v74, %v76
    %v78 = vrot.slane %v44, %v77
    %v80 = vunpack.c.l.s4 1983009808
    %v81 = vunpack.c.0.s8 %v80
    %v82 = vlaneseq
    %v83 = vshrl.u32 %v82, 7
    %v84 = vsub.s32 %v81, %v83
    %v85 = vrot.slane %v71, %v84
    %v86 = vcombine.high %v78, %v78
    %v87 = vcombine.high %v85, %v85
    %v96 = vtrunc.f32 %v61
    %v97 = vtrunc.f32 %v69
    %v98 = vtrunc.f32 %v68
    %v99 = vtrunc.f32 %v70
    %v100 = vtrunc.f32 %v78
    %v101 = vtrunc.f32 %v86
    %v102 = vtrunc.f32 %v85
    %v103 = vtrunc.f32 %v87
    %v104 = vpack.c.f32.eXmY %v96, %v96, 56
    %v108 = vpack.c.b8 %v104, %v104
    %v110 = vpack.c.f32.eXmY %v97, %v97, 56
    %v114 = vpack.c.b8 %v110, %v110
    %v116 = vpack.c.f32.eXmY %v98, %v98, 56
    %v120 = vpack.c.b8 %v116, %v116
    %v122 = vpack.c.f32.eXmY %v99, %v99, 56
    %v126 = vpack.c.b8 %v122, %v122
    %v128 = vpack.c.f32.eXmY %v100, %v100, 56
    %v132 = vpack.c.b8 %v128, %v128
    %v134 = vpack.c.f32.eXmY %v101, %v101, 56
    %v138 = vpack.c.b8 %v134, %v134
    %v140 = vpack.c.f32.eXmY %v102, %v102, 56
    %v144 = vpack.c.b8 %v140, %v140
    %v146 = vpack.c.f32.eXmY %v103, %v103, 56
    %v150 = vpack.c.b8 %v146, %v146
    %v152 = vcombine.low %v108, %v114
    %v153 = vcombine.low %v120, %v126
    %v154 = vcombine.low %v132, %v138
    %v155 = vcombine.low %v144, %v150
    %v157 = vunpack.c.l.s4 1966171168
    %v158 = vunpack.c.0.s8 %v157
    %v159 = vlaneseq
    %v160 = vshrl.u32 %v159, 7
    %v161 = vsub.s32 %v158, %v160
    %v162 = vrot.slane %v152, %v161
    %v164 = vunpack.c.l.s4 1966171168
    %v165 = vunpack.c.0.s8 %v164
    %v166 = vlaneseq
    %v167 = vshrl.u32 %v166, 7
    %v168 = vsub.s32 %v165, %v167
    %v169 = vrot.slane %v153, %v168
    %v171 = vunpack.c.l.s4 1966171168
    %v172 = vunpack.c.0.s8 %v171
    %v173 = vlaneseq
    %v174 = vshrl.u32 %v173, 7
    %v175 = vsub.s32 %v172, %v174
    %v176 = vrot.slane %v154, %v175
    %v178 = vunpack.c.l.s4 1966171168
    %v179 = vunpack.c.0.s8 %v178
    %v180 = vlaneseq
    %v181 = vshrl.u32 %v180, 7
    %v182 = vsub.s32 %v179, %v181
    %v183 = vrot.slane %v155, %v182
    %v184 = vcombine.low %v162, %v169
    %v185 = vcombine.low %v176, %v183
    %v187 = vunpack.c.l.s4 1966171168
    %v188 = vunpack.c.0.s8 %v187
    %v189 = vlaneseq
    %v190 = vshrl.u32 %v189, 7
    %v191 = vsub.s32 %v188, %v190
    %v192 = vrot.slane %v184, %v191
    %v194 = vunpack.c.l.s4 1966171168
    %v195 = vunpack.c.0.s8 %v194
    %v196 = vlaneseq
    %v197 = vshrl.u32 %v196, 7
    %v198 = vsub.s32 %v195, %v197
    %v199 = vrot.slane %v185, %v198
    %v200 = vcombine.low %v192, %v199
    %vm201 = vcmask 1040384
    %vm202 = vsmask.f32 256
    %vm203 = vmand %vm201, %vm202
    %vm204 = vcmask 1041409
    %vm205 = vsmask.f32 1280
    %vm206 = vmand %vm204, %vm205
    %vm207 = vmor %vm206, %vm203
    %vm208 = vcmask 1042434
    %vm209 = vsmask.f32 2304
    %vm210 = vmand %vm208, %vm209
    %vm211 = vmor %vm210, %vm207
    %vm212 = vcmask 1043459
    %vm213 = vsmask.f32 3328
    %vm214 = vmand %vm212, %vm213
    %vm215 = vmor %vm214, %vm211
    %vm216 = vcmask 1044484
    %vm217 = vsmask.f32 4352
    %vm218 = vmand %vm216, %vm217
    %vm219 = vmor %vm218, %vm215
    %vm220 = vcmask 1045509
    %vm221 = vsmask.f32 5376
    %vm222 = vmand %vm220, %vm221
    %vm223 = vmor %vm222, %vm219
    %vm224 = vcmask 1046534
    %vm225 = vsmask.f32 6400
    %vm226 = vmand %vm224, %vm225
    %vm227 = vmor %vm226, %vm223
    %vm228 = vcmask 1047559
    %vm229 = vsmask.f32 7424
    %vm230 = vmand %vm228, %vm229
    %vm231 = vmor %vm230, %vm227
    %v232 = vld [vmem:[%s3] sm:$0xff]
    %v233 = vsel %vm231, %v200, %v232
    %234 = vst [vmem:[%s3] sm:$0xff] %v233
    // Predicated region
    $region14: #{_pallas_quantize.1} parent=1 // pred_check
      _
    $region15: #{_pallas_quantize.1} parent=1 // pred_check_branch
      %236 = sbr.rel (0) target = $region17
    $region16: #{_pallas_quantize.1} parent=1 // pred_region
      _
    $region17: #{_pallas_quantize.1} parent=1 // pred_fallthru
      _
    // Predicated region
    $region18: #{_pallas_quantize.1} parent=1 // pred_check
      _
    $region19: #{_pallas_quantize.1} parent=1 // pred_check_branch
      %238 = sbr.rel (0) target = $region21
    $region20: #{_pallas_quantize.1} parent=1 // pred_region
      _
    $region21: #{_pallas_quantize.1} parent=1 // pred_fallthru
      _
    // Predicated region
    $region22: #{_pallas_quantize.1} parent=1 // pred_check
      _
    $region23: #{_pallas_quantize.1} parent=1 // pred_check_branch
      %240 = sbr.rel (0) target = $region25
    $region24: #{_pallas_quantize.1} parent=1 // pred_region
      _
    $region25: #{_pallas_quantize.1} parent=1 // pred_fallthru
      _
    // Predicated region
    $region26: #{_pallas_quantize.1} parent=1 // pred_check
      _
    $region27: #{_pallas_quantize.1} parent=1 // pred_check_branch
      %242 = sbr.rel (0) target = $region29
    $region28: #{_pallas_quantize.1} parent=1 // pred_region
      _
    $region29: #{_pallas_quantize.1} parent=1 // pred_fallthru
      _
    %243 = vsyncpa [#allocation3], 1

</llo_original>
